<compile_context>
chip_gen: v5e
topology: v5e:2x2
jax: 0.10.0
libtpu: 0.0.40
codegen_flags: <defaults>
</compile_context>

<pallas_src>
import jax
import jax.numpy as jnp
from jax import lax
from jax.experimental import pallas as pl
from jax.experimental.pallas import tpu as pltpu  # noqa: F401  (TPU backend)

_LANES = 128
# dot_general dims for A(B,K) @ Bt(N,K) -> (B,N): contract last axis of both
# (w2t stays in PyTorch's (out_features, in_features) layout -> no transpose).
_NT_DIMS = (((1,), (1,)), ((), ()))


def _round_up_lanes(n: int) -> int:
    return max(_LANES, ((n + _LANES - 1) // _LANES) * _LANES)


def make_decoder_kernel(eps: float, batch: int):
    inv_b = 1.0 / float(batch)

    def decoder_kernel(x_ref, w1_ref, vec_ref, w2t_ref, b2_ref, o_ref):
        # Packed per-hidden-feature vectors: row 0 = b1, 1 = gamma, 2 = beta.
        vec = vec_ref[...]                                             # (3, Hp)
        b1 = vec[0:1, :]
        gamma = vec[1:2, :]
        beta = vec[2:3, :]

        # ---- Linear 1 + Tanh (MXU + EUP) ----
        h = jnp.dot(x_ref[...], w1_ref[...],
                    preferred_element_type=jnp.float32)
        h = jnp.tanh(h + b1)                                           # (B, Hp)

        # ---- BatchNorm1d batch statistics, single pass over h ----
        # mean = E[h], var = E[h^2] - mean^2 (biased), clamped at 0 for
        # robustness; eps = 0.8 dominates anyway and h is bounded in [-1, 1].
        mean = jnp.sum(h, axis=0, keepdims=True) * inv_b               # (1, Hp)
        ex2 = jnp.sum(h * h, axis=0, keepdims=True) * inv_b            # (1, Hp)
        var = jnp.maximum(ex2 - mean * mean, 0.0)
        scale = lax.rsqrt(var + eps) * gamma                           # (1, Hp)
        shift = beta - mean * scale                                    # (1, Hp)
        # Padded hidden columns: gamma = beta = 0 -> scale = shift = 0, so
        # h_bn is exactly 0 there (and w2t's padded in-features are 0 too).

        # ---- BN applied on the activation side (cheap (B,Hp) VPU op) ----
        h_bn = h * scale + shift                                       # (B, Hp)

        # ---- Linear 2: single MXU matmul against (N_pad, Hp) weights ----
        out = lax.dot_general(h_bn, w2t_ref[...], _NT_DIMS,
                              preferred_element_type=jnp.float32)      # (B, Np)
        o_ref[...] = (out + b2_ref[...]).astype(o_ref.dtype)

    return decoder_kernel


def prepare_params(params):
    """One-time parameter prep (hoisted out of the hot forward path):
    pad the hidden axis and the output-feature axis to 128 lanes and pack the
    tiny per-hidden-feature vectors into a single (3, H_pad) array.
    gamma/beta padding MUST be zero so padded features contribute nothing."""
    w1, b1, gamma, beta, w2t, b2 = params
    _d, h = w1.shape
    n_out = w2t.shape[0]
    h_pad = _round_up_lanes(h)
    n_pad = _round_up_lanes(n_out)

    w1_p = jnp.pad(w1, ((0, 0), (0, h_pad - h)))
    vec = jnp.concatenate(
        [jnp.pad(b1, ((0, 0), (0, h_pad - h))),
         jnp.pad(gamma, ((0, 0), (0, h_pad - h))),   # pad with zeros, not 1s
         jnp.pad(beta, ((0, 0), (0, h_pad - h)))],
        axis=0)                                      # (3, H_pad)
    w2t_p = jnp.pad(w2t, ((0, n_pad - n_out), (0, h_pad - h)))
    b2_p = jnp.pad(b2, ((0, 0), (0, n_pad - n_out)))
    return (w1_p, vec, w2t_p, b2_p), n_out


def decoder_forward(x, prepared_params, n_out, eps=0.8):
    """x: (B, latent_dim). prepared_params from `prepare_params`."""
    w1_p, vec, w2t_p, b2_p = prepared_params
    B = x.shape[0]
    n_pad = w2t_p.shape[0]

    full = lambda a: pl.BlockSpec(a.shape, lambda: (0,) * a.ndim)

    out_p = pl.pallas_call(
        make_decoder_kernel(eps, B),
        out_shape=jax.ShapeDtypeStruct((B, n_pad), jnp.float32),
        grid_spec=pl.GridSpec(
            grid=(),  # whole problem (<50 KiB) fits in VMEM; one program
            in_specs=[full(x), full(w1_p), full(vec), full(w2t_p), full(b2_p)],
            out_specs=pl.BlockSpec((B, n_pad), lambda: (0, 0)),
        ),
    )(x, w1_p, vec, w2t_p, b2_p)
    # TODO(synk): if the consumer can take padded output, hoist this slice too.
    return out_p[:, :n_out]


def init_params(key, latent_dim, hidden_size, n_outputs):
    k1, k2, k3, k4 = jax.random.split(key, 4)
    # PyTorch nn.Linear init: U(-1/sqrt(fan_in), 1/sqrt(fan_in))
    lim1 = 1.0 / jnp.sqrt(latent_dim)
    lim2 = 1.0 / jnp.sqrt(hidden_size)
    w1 = jax.random.uniform(k1, (latent_dim, hidden_size), jnp.float32, -lim1, lim1)
    b1 = jax.random.uniform(k2, (1, hidden_size), jnp.float32, -lim1, lim1)
    # BatchNorm1d default affine init: gamma = 1, beta = 0
    gamma = jnp.ones((1, hidden_size), jnp.float32)
    beta = jnp.zeros((1, hidden_size), jnp.float32)
    # Second Linear kept in PyTorch (out_features, in_features) layout.
    w2t = jax.random.uniform(k3, (n_outputs, hidden_size), jnp.float32, -lim2, lim2)
    b2 = jax.random.uniform(k4, (1, n_outputs), jnp.float32, -lim2, lim2)
    return (w1, b1, gamma, beta, w2t, b2)


def decoder_ref(x, params, eps=0.8):
    """Pure-JAX reference mirroring the PyTorch forward (training-mode BN)."""
    w1, b1, gamma, beta, w2t, b2 = params
    h = jnp.tanh(x @ w1 + b1)
    mean = jnp.mean(h, axis=0, keepdims=True)
    var = jnp.mean((h - mean) ** 2, axis=0, keepdims=True)  # biased variance
    h_bn = (h - mean) / jnp.sqrt(var + eps) * gamma + beta
    return h_bn @ w2t.T + b2


if __name__ == "__main__":
    latent_dim, hidden_size, n_outputs = 16, 64, 8   # module default hidden_size=64
    batch = 8

    key = jax.random.PRNGKey(0)
    kx, kp = jax.random.split(key)
    x = jax.random.normal(kx, (batch, latent_dim), dtype=jnp.float32)
    params = init_params(kp, latent_dim, hidden_size, n_outputs)

    # One-time prep (padding + vector packing) outside the hot path.
    prepped, n_out = prepare_params(params)

    out = decoder_forward(x, prepped, n_out, eps=0.8)
    out = jax.block_until_ready(out)

    ref = decoder_ref(x, params, eps=0.8)
    assert out.shape == (batch, n_outputs)
    # Slightly looser tolerance: the BN reassociation in f32.
    assert jnp.allclose(out, ref, atol=1e-4, rtol=1e-4), "mismatch vs reference"

    print("KERNEL_OK")
</pallas_src>

<mosaic_0001>
module attributes {stable_mosaic.version = 11 : i64} {
  func.func @decoder_kernel(%arg0: memref<8x16xf32, #tpu.memory_space<vmem>>, %arg1: memref<16x128xf32, #tpu.memory_space<vmem>>, %arg2: memref<3x128xf32, #tpu.memory_space<vmem>>, %arg3: memref<128x128xf32, #tpu.memory_space<vmem>>, %arg4: memref<1x128xf32, #tpu.memory_space<vmem>>, %arg5: memref<8x128xf32, #tpu.memory_space<vmem>>) attributes {dimension_semantics = [], scalar_prefetch = 0 : i64, scratch_operands = 0 : i64, tpu.core_type = #tpu.core_type<tc>} {
    %c0 = arith.constant 0 : index
    %c0_0 = arith.constant 0 : index
    %0 = vector.load %arg2[%c0, %c0_0] : memref<3x128xf32, #tpu.memory_space<vmem>>, vector<3x128xf32>
    %1 = vector.extract_strided_slice %0 {offsets = [0, 0], sizes = [1, 128], strides = [1, 1]} : vector<3x128xf32> to vector<1x128xf32>
    %2 = vector.extract_strided_slice %0 {offsets = [1, 0], sizes = [1, 128], strides = [1, 1]} : vector<3x128xf32> to vector<1x128xf32>
    %3 = vector.extract_strided_slice %0 {offsets = [2, 0], sizes = [1, 128], strides = [1, 1]} : vector<3x128xf32> to vector<1x128xf32>
    %c0_1 = arith.constant 0 : index
    %c0_2 = arith.constant 0 : index
    %4 = vector.load %arg0[%c0_1, %c0_2] : memref<8x16xf32, #tpu.memory_space<vmem>>, vector<8x16xf32>
    %c0_3 = arith.constant 0 : index
    %c0_4 = arith.constant 0 : index
    %5 = vector.load %arg1[%c0_3, %c0_4] : memref<16x128xf32, #tpu.memory_space<vmem>>, vector<16x128xf32>
    %cst = arith.constant dense<0.000000e+00> : vector<8x128xf32>
    %6 = tpu.matmul %4, %5, %cst {dimension_numbers = #tpu.dot_dimension_numbers<[1], [0], [0], [1], [0, 0, 1, 1], [], []>} : vector<8x16xf32>, vector<16x128xf32>, vector<8x128xf32> -> vector<8x128xf32>
    %7 = vector.broadcast %1 : vector<1x128xf32> to vector<8x128xf32>
    %8 = arith.addf %6, %7 : vector<8x128xf32>
    %9 = math.tanh %8 : vector<8x128xf32>
    %cst_5 = arith.constant dense<0.000000e+00> : vector<128xf32>
    %10 = vector.multi_reduction <add>, %9, %cst_5 [0] : vector<8x128xf32> to vector<128xf32>
    %11 = vector.shape_cast %10 : vector<128xf32> to vector<1x128xf32>
    %cst_6 = arith.constant 1.250000e-01 : f32
    %12 = vector.broadcast %cst_6 : f32 to vector<1x128xf32>
    %13 = arith.mulf %11, %12 : vector<1x128xf32>
    %14 = arith.mulf %9, %9 : vector<8x128xf32>
    %cst_7 = arith.constant dense<0.000000e+00> : vector<128xf32>
    %15 = vector.multi_reduction <add>, %14, %cst_7 [0] : vector<8x128xf32> to vector<128xf32>
    %16 = vector.shape_cast %15 : vector<128xf32> to vector<1x128xf32>
    %cst_8 = arith.constant 1.250000e-01 : f32
    %17 = vector.broadcast %cst_8 : f32 to vector<1x128xf32>
    %18 = arith.mulf %16, %17 : vector<1x128xf32>
    %19 = arith.mulf %13, %13 : vector<1x128xf32>
    %20 = arith.subf %18, %19 : vector<1x128xf32>
    %cst_9 = arith.constant 0.000000e+00 : f32
    %21 = vector.broadcast %cst_9 : f32 to vector<1x128xf32>
    %22 = arith.maximumf %20, %21 : vector<1x128xf32>
    %cst_10 = arith.constant 8.000000e-01 : f32
    %23 = vector.broadcast %cst_10 : f32 to vector<1x128xf32>
    %24 = arith.addf %22, %23 : vector<1x128xf32>
    %25 = math.rsqrt %24 : vector<1x128xf32>
    %26 = arith.mulf %25, %2 : vector<1x128xf32>
    %27 = arith.mulf %13, %26 : vector<1x128xf32>
    %28 = arith.subf %3, %27 : vector<1x128xf32>
    %29 = vector.broadcast %26 : vector<1x128xf32> to vector<8x128xf32>
    %30 = arith.mulf %9, %29 : vector<8x128xf32>
    %31 = vector.broadcast %28 : vector<1x128xf32> to vector<8x128xf32>
    %32 = arith.addf %30, %31 : vector<8x128xf32>
    %c0_11 = arith.constant 0 : index
    %c0_12 = arith.constant 0 : index
    %33 = vector.load %arg3[%c0_11, %c0_12] : memref<128x128xf32, #tpu.memory_space<vmem>>, vector<128x128xf32>
    %cst_13 = arith.constant dense<0.000000e+00> : vector<8x128xf32>
    %34 = tpu.matmul %32, %33, %cst_13 {dimension_numbers = #tpu.dot_dimension_numbers<[1], [1], [0], [0], [0, 0, 1, 0], [], []>} : vector<8x128xf32>, vector<128x128xf32>, vector<8x128xf32> -> vector<8x128xf32>
    %c0_14 = arith.constant 0 : index
    %c0_15 = arith.constant 0 : index
    %35 = vector.load %arg4[%c0_14, %c0_15] : memref<1x128xf32, #tpu.memory_space<vmem>>, vector<1x128xf32>
    %36 = vector.broadcast %35 : vector<1x128xf32> to vector<8x128xf32>
    %37 = arith.addf %34, %36 : vector<8x128xf32>
    %c0_16 = arith.constant 0 : index
    %c0_17 = arith.constant 0 : index
    %38 = vector.load %arg5[%c0_16, %c0_17] : memref<8x128xf32, #tpu.memory_space<vmem>>, vector<8x128xf32>
    tpu.vector_store %arg5[%c0_16, %c0_17], %37 {strides = array<i32>} : memref<8x128xf32, #tpu.memory_space<vmem>>, vector<8x128xf32>,
    return
  }
}

</mosaic_0001>

<llo_original>
// kernel: tpu_custom_call.1
$region0: #{tpu_custom_call.1}
  #allocation0 [shape = 'u32[]', space=smem, size = 0x4, offset = 0x4, fixed_abs, tag = 'smem constant byte address 0x4 - core index']
  #allocation1 [shape = 'u32[72,128]{1,0:T(1,128)}', space=vmem, size = 0x9000, scoped, tag = 'internal scratch']
  %s0 = inlined_call_operand.hbm [shape: f32[8,16], index: 0, kind: input, shape index: {}]
  %s1 = inlined_call_operand.hbm [shape: f32[16,128], index: 1, kind: input, shape index: {}]
  %s2 = inlined_call_operand.hbm [shape: f32[3,128], index: 2, kind: input, shape index: {}]
  %s3 = inlined_call_operand.hbm [shape: f32[128,128], index: 3, kind: input, shape index: {}]
  %s4 = inlined_call_operand.vmem [shape: f32[1,128], index: 4, kind: input, shape index: {}]
  %s5 = inlined_call_operand.hbm [shape: f32[8,128], index: 5, kind: output, shape index: {}]
  %s6 = sld [smem:[#allocation0]]
  $region46: #{tpu_custom_call.1} parent=0
    _
  %s8 = ssub.s32 1, %s6
  %s9 = scalar_select 0, %s8, %s6
  $region1: #{tpu_custom_call.1} parent=0
    #allocation2 [shape = 'u8[4096]{0}', space=vmem, size = 0x1000, scoped, tag = 'input window, operand 0, single buffered']
    #allocation3 [shape = 's32[1]{0}', space=sflag, size = 0x4, scoped, tag = 'scoped memory for tpu_custom_call.1']
    #allocation4 [shape = 's32[1]{0}', space=sflag, size = 0x4, scoped, tag = 'scoped memory for tpu_custom_call.1']
    #allocation5 [shape = 'u8[8192]{0}', space=vmem, size = 0x2000, scoped, tag = 'input window, operand 1, single buffered']
    #allocation6 [shape = 's32[1]{0}', space=sflag, size = 0x4, scoped, tag = 'scoped memory for tpu_custom_call.1']
    #allocation7 [shape = 'u8[2048]{0}', space=vmem, size = 0x800, scoped, tag = 'input window, operand 2, single buffered']
    #allocation8 [shape = 'u8[65536]{0}', space=vmem, size = 0x10000, scoped, tag = 'input window, operand 3, single buffered']
    #allocation9 [shape = 's32[1]{0}', space=sflag, size = 0x4, scoped, tag = 'scoped memory for tpu_custom_call.1']
    #allocation10 [shape = 'u8[4096]{0}', space=vmem, size = 0x1000, scoped, tag = 'output window, operand 0, single buffered']
    %10 = vsyncpa [#allocation3], 0
    %11 = vsyncpa [#allocation6], 0
    %12 = vsyncpa [#allocation9], 0
    %13 = vsyncpa [#allocation4], 0
    // Predicated region
    $region2: #{tpu_custom_call.1} parent=1 // pred_check
      _
    $region3: #{tpu_custom_call.1} parent=1 // pred_check_branch
      %15 = sbr.rel (0) target = $region5
    $region4: #{tpu_custom_call.1} parent=1 // pred_region
      %17 = vsyncadd [#allocation3], 0
      %s19 = sshll.u32 %s0, 4
      %s20 = int_to_ptr.hbm [resolvable:$true] %s19
      %s21 = sshll.u32 [#allocation2], 4
      %s22 = int_to_ptr.vmem [resolvable:$true] %s21
      %24 = dma.hbm_to_vmem [thread:$0]  %s20, 128, %s22, [#allocation3]
    $region5: #{tpu_custom_call.1} parent=1 // pred_fallthru
      _
    // Predicated region
    $region6: #{tpu_custom_call.1} parent=1 // pred_check
      _
    $region7: #{tpu_custom_call.1} parent=1 // pred_check_branch
      %26 = sbr.rel (0) target = $region9
    $region8: #{tpu_custom_call.1} parent=1 // pred_region
      %28 = vsyncadd [#allocation6], 0
      %s29 = sshll.u32 %s1, 4
      %s30 = int_to_ptr.hbm [resolvable:$true] %s29
      %s31 = sshll.u32 [#allocation5], 4
      %s32 = int_to_ptr.vmem [resolvable:$true] %s31
      %37 = dma.hbm_to_vmem [thread:$0]  %s30, 256, %s32, [#allocation6], 128, 128, 8
    $region9: #{tpu_custom_call.1} parent=1 // pred_fallthru
      _
    // Predicated region
    $region10: #{tpu_custom_call.1} parent=1 // pred_check
      _
    $region11: #{tpu_custom_call.1} parent=1 // pred_check_branch
      %39 = sbr.rel (0) target = $region13
    $region12: #{tpu_custom_call.1} parent=1 // pred_region
      %41 = vsyncadd [#allocation6], 0
      %s43 = sshll.u32 %s2, 4
      %s44 = int_to_ptr.hbm [resolvable:$true] %s43
      %s45 = sshll.u32 [#allocation7], 4
      %s46 = int_to_ptr.vmem [resolvable:$true] %s45
      %48 = dma.hbm_to_vmem [thread:$0]  %s44, 64, %s46, [#allocation6]
    $region13: #{tpu_custom_call.1} parent=1 // pred_fallthru
      _
    // Predicated region
    $region14: #{tpu_custom_call.1} parent=1 // pred_check
      _
    $region15: #{tpu_custom_call.1} parent=1 // pred_check_branch
      %50 = sbr.rel (0) target = $region17
    $region16: #{tpu_custom_call.1} parent=1 // pred_region
      %52 = vsyncadd [#allocation9], 0
      %s53 = sshll.u32 %s3, 4
      %s54 = int_to_ptr.hbm [resolvable:$true] %s53
      %s55 = sshll.u32 [#allocation8], 4
      %s56 = int_to_ptr.vmem [resolvable:$true] %s55
      %61 = dma.hbm_to_vmem [thread:$0]  %s54, 2048, %s56, [#allocation9], 128, 128, 8
    $region17: #{tpu_custom_call.1} parent=1 // pred_fallthru
      _
    // Predicated region
    $region18: #{tpu_custom_call.1} parent=1 // pred_check
      _
    $region19: #{tpu_custom_call.1} parent=1 // pred_check_branch
      %63 = sbr.rel (0) target = $region21
    $region20: #{tpu_custom_call.1} parent=1 // pred_region
      _
    $region21: #{tpu_custom_call.1} parent=1 // pred_fallthru
      _
    // Predicated region
    $region22: #{tpu_custom_call.1} parent=1 // pred_check
      _
    $region23: #{tpu_custom_call.1} parent=1 // pred_check_branch
      %65 = sbr.rel (0) target = $region25
    $region24: #{tpu_custom_call.1} parent=1 // pred_region
      %67 = dma.done [#allocation3], 128
    $region25: #{tpu_custom_call.1} parent=1 // pred_fallthru
      _
    // Predicated region
    $region26: #{tpu_custom_call.1} parent=1 // pred_check
      _
    $region27: #{tpu_custom_call.1} parent=1 // pred_check_branch
      %69 = sbr.rel (0) target = $region29
    $region28: #{tpu_custom_call.1} parent=1 // pred_region
      %71 = dma.done [#allocation6], 256
    $region29: #{tpu_custom_call.1} parent=1 // pred_fallthru
      _
    // Predicated region
    $region30: #{tpu_custom_call.1} parent=1 // pred_check
      _
    $region31: #{tpu_custom_call.1} parent=1 // pred_check_branch
      %73 = sbr.rel (0) target = $region33
    $region32: #{tpu_custom_call.1} parent=1 // pred_region
      %75 = dma.done [#allocation6], 64
    $region33: #{tpu_custom_call.1} parent=1 // pred_fallthru
      _
    // Predicated region
    $region34: #{tpu_custom_call.1} parent=1 // pred_check
      _
    $region35: #{tpu_custom_call.1} parent=1 // pred_check_branch
      %77 = sbr.rel (0) target = $region37
    $region36: #{tpu_custom_call.1} parent=1 // pred_region
      %79 = dma.done [#allocation9], 2048
    $region37: #{tpu_custom_call.1} parent=1 // pred_fallthru
      _
    %v80 = vld [vmem:[#allocation7] sm:$0x7]
    %v81 = vld [vmem:[#allocation2] sm:$0xff]
    %v82 = vld [vmem:[#allocation5] sm:$0xff]
    %v83 = vld [vmem:[#allocation5 + $0x8] sm:$0xff]
    %v84 = vperm.slane %v80, 0
    %vm85 = vcmask 130048
    %v87 = vsel %vm85, %v81, 0
    %89 = vmatpush.msra.mxu0 0.0
    %90 = vmatpush.msra.mxu0 0.0
    %91 = vmatpush.msra.mxu0 0.0
    %92 = vmatpush.msra.mxu0 0.0
    %93 = vmatpush.msra.mxu0 0.0
    %94 = vmatpush.msra.mxu0 0.0
    %95 = vmatpush.msra.mxu0 0.0
    %96 = vmatpush.msra.mxu0 0.0
    %97 = vmatpush.msra.mxu0 0.0
    %98 = vmatpush.msra.mxu0 0.0
    %99 = vmatpush.msra.mxu0 0.0
    %100 = vmatpush.msra.mxu0 0.0
    %101 = vmatpush.msra.mxu0 0.0
    %102 = vmatpush.msra.mxu0 0.0
    %103 = vmatpush.msra.mxu0 %v83
    %104 = vmatpush.msra.mxu0 %v82
    %105 = vmatmul.f32.gmra.mxu0 %v87
    %v106 = vpop.f32.mrf.mxu0
    %v107 = vadd.f32 %v84, %v106
    %108 = vdwg.mxu0
    %v109 = vtanh.pop %v107
    %v110 = vrot.slane %v109, 4
    %v111 = vadd.f32 %v109, %v110
    %v112 = vrot.slane %v111, 2
    %v113 = vadd.f32 %v111, %v112
    %v114 = vrot.slane %v113, 1
    %v115 = vadd.f32 %v113, %v114
    %v116 = vmul.f32 %v115, 0.125
    %v117 = vmul.f32 %v109, %v109
    %v118 = vrot.slane %v117, 4
    %v119 = vadd.f32 %v117, %v118
    %v120 = vrot.slane %v119, 2
    %v121 = vadd.f32 %v119, %v120
    %v122 = vrot.slane %v121, 1
    %v123 = vadd.f32 %v121, %v122
    %v124 = vmul.f32 %v123, 0.125
    %v125 = vmul.f32 %v116, %v116
    %v126 = vsub.f32 %v124, %v125
    %v127 = vmax.f32 %v126, 0.0
    %v128 = vadd.f32 %v127, 0.8
    %v129 = vrsqrt.pop %v128
    %v130 = vmul.f32 %v129, %v128
    %v131 = vmul.f32 %v130, %v129
    %v132 = vmul.f32 0.5, %v131
    %v133 = vsub.f32 1.5, %v132
    %v134 = vmul.f32 %v129, %v133
    %vm135 = vweird.f32 %v128
    %vm136 = vweird.f32 %v129
    %vm137 = vmor %vm135, %vm136
    %v138 = vsel %vm137, %v129, %v134
    %v139 = vmul.f32 %v138, %v80
    %v140 = vmul.f32 %v116, %v139
    %v142 = vrot.slane %v140, 7
    %v144 = vsub.f32 %v80, %v142
    %v145 = vperm.slane %v139, 1
    %v146 = vmul.f32 %v109, %v145
    %v147 = vperm.slane %v144, 2
    %v148 = vadd.f32 %v146, %v147
    %v149 = vld [vmem:[#allocation8] sm:$0xff]
    %v150 = vld [vmem:[#allocation8 + $0x8] sm:$0xff]
    %v151 = vld [vmem:[#allocation8 + $0x10] sm:$0xff]
    %v152 = vld [vmem:[#allocation8 + $0x18] sm:$0xff]
    %v153 = vld [vmem:[#allocation8 + $0x20] sm:$0xff]
    %v154 = vld [vmem:[#allocation8 + $0x28] sm:$0xff]
    %v155 = vld [vmem:[#allocation8 + $0x30] sm:$0xff]
    %v156 = vld [vmem:[#allocation8 + $0x38] sm:$0xff]
    %v157 = vld [vmem:[#allocation8 + $0x40] sm:$0xff]
    %v158 = vld [vmem:[#allocation8 + $0x48] sm:$0xff]
    %v159 = vld [vmem:[#allocation8 + $0x50] sm:$0xff]
    %v160 = vld [vmem:[#allocation8 + $0x58] sm:$0xff]
    %v161 = vld [vmem:[#allocation8 + $0x60] sm:$0xff]
    %v162 = vld [vmem:[#allocation8 + $0x68] sm:$0xff]
    %v163 = vld [vmem:[#allocation8 + $0x70] sm:$0xff]
    %v164 = vld [vmem:[#allocation8 + $0x78] sm:$0xff]
    %v165 = vld [vmem:[%s4] sm:$0x1]
    %v167 = vperm.slane %v165, 0
    %169 = vmatpush.xpose.msra.mxu0 %v164
    %170 = vmatpush.xpose.msra.mxu0 %v163
    %171 = vmatpush.xpose.msra.mxu0 %v162
    %172 = vmatpush.xpose.msra.mxu0 %v161
    %173 = vmatpush.xpose.msra.mxu0 %v160
    %174 = vmatpush.xpose.msra.mxu0 %v159
    %175 = vmatpush.xpose.msra.mxu0 %v158
    %176 = vmatpush.xpose.msra.mxu0 %v157
    %177 = vmatpush.xpose.msra.mxu0 %v156
    %178 = vmatpush.xpose.msra.mxu0 %v155
    %179 = vmatpush.xpose.msra.mxu0 %v154
    %180 = vmatpush.xpose.msra.mxu0 %v153
    %181 = vmatpush.xpose.msra.mxu0 %v152
    %182 = vmatpush.xpose.msra.mxu0 %v151
    %183 = vmatpush.xpose.msra.mxu0 %v150
    %184 = vmatpush.xpose.msra.mxu0 %v149
    %185 = vmatmul.f32.gmra.mxu0 %v148
    %v186 = vpop.f32.mrf.mxu0
    %v187 = vadd.f32 %v167, %v186
    %188 = vdwg.mxu0
    %189 = vst [vmem:[#allocation10] sm:$0xff] %v187
    // Predicated region
    $region38: #{tpu_custom_call.1} parent=1 // pred_check
      _
    $region39: #{tpu_custom_call.1} parent=1 // pred_check_branch
      %191 = sbr.rel (0) target = $region41
    $region40: #{tpu_custom_call.1} parent=1 // pred_region
      %193 = vsyncadd [#allocation4], 0
      %s195 = sshll.u32 [#allocation10], 4
      %s196 = int_to_ptr.vmem [resolvable:$true] %s195
      %s197 = sshll.u32 %s5, 4
      %s198 = int_to_ptr.hbm [resolvable:$true] %s197
      %200 = dma.vmem_to_hbm [thread:$0]  %s196, 128, %s198, [#allocation4]
    $region41: #{tpu_custom_call.1} parent=1 // pred_fallthru
      _
    // Predicated region
    $region42: #{tpu_custom_call.1} parent=1 // pred_check
      _
    $region43: #{tpu_custom_call.1} parent=1 // pred_check_branch
      %202 = sbr.rel (0) target = $region45
    $region44: #{tpu_custom_call.1} parent=1 // pred_region
      %204 = dma.done [#allocation4], 128
    $region45: #{tpu_custom_call.1} parent=1 // pred_fallthru
      _
    %205 = vsyncpa [#allocation3], 1
    %206 = vsyncpa [#allocation6], 1
    %207 = vsyncpa [#allocation9], 1
    %208 = vsyncpa [#allocation4], 1

</llo_original>
